<compile_context>
chip_gen: v7x
topology: tpu7x:2x2x1
jax: 0.10.0
libtpu: 0.0.40
codegen_flags: <defaults>
</compile_context>

<pallas_src>
import jax
import jax.numpy as jnp
from jax.experimental import pallas as pl
from jax.experimental.pallas import tpu as pltpu

_LANES = 512           # last-dim width: multiple of 128 -> lane-dense stores
_MAX_TILE_ROWS = 512   # 512 x 512 f32 = 1 MiB per block per buffer


def _round_up(a: int, b: int) -> int:
    return ((a + b - 1) // b) * b


def _sum_sumsq_kernel(x_ref, sum_ref, sumsq_ref):
    """Accumulate sum(x) and sum(x*x) over a 1-D grid of row tiles."""
    @pl.when(pl.program_id(0) == 0)
    def _():
        sum_ref[...] = jnp.zeros_like(sum_ref)
        sumsq_ref[...] = jnp.zeros_like(sumsq_ref)

    x = x_ref[...].astype(jnp.float32)
    sum_ref[...] += jnp.sum(x)          # per-tile f32 partial accumulation
    sumsq_ref[...] += jnp.sum(x * x)


def _add_noise_kernel(nl_ref, x_ref, noise_ref, o_ref):
    """out = x + noise * noise_level   (noise_level is a scalar in SMEM)."""
    nl = nl_ref[0]
    x = x_ref[...].astype(jnp.float32)
    o_ref[...] = (x + noise_ref[...] * nl).astype(o_ref.dtype)


def _as_padded_slab(flat, rows_p):
    pad = rows_p * _LANES - flat.shape[0]
    return jnp.pad(flat, (0, pad)).reshape(rows_p, _LANES)


def noise_forward(x, uniform_noise, std_noise=0.1):
    """x: (N, C, H, W); uniform_noise: same shape, uniform [0, 1) floats."""
    orig_shape = x.shape
    n_elems = x.size

    flat_x = x.reshape(-1)
    flat_n = uniform_noise.reshape(-1).astype(jnp.float32)   # keep noise f32

    rows = _round_up(n_elems, _LANES) // _LANES
    tile_rows = min(_MAX_TILE_ROWS, _round_up(rows, 8))
    rows_p = _round_up(rows, tile_rows)
    num_tiles = rows_p // tile_rows

    x2 = _as_padded_slab(flat_x, rows_p)
    n2 = _as_padded_slab(flat_n, rows_p)

    tile_spec = pl.BlockSpec((tile_rows, _LANES), lambda i: (i, 0))
    acc_spec = pl.BlockSpec((1, 1), lambda i: (0, 0))

    # ---- Pass 1: streaming global reduction: sum(x), sum(x^2). -------------
    s, ss = pl.pallas_call(
        _sum_sumsq_kernel,
        out_shape=(jax.ShapeDtypeStruct((1, 1), jnp.float32),
                   jax.ShapeDtypeStruct((1, 1), jnp.float32)),
        grid=(num_tiles,),
        in_specs=[tile_spec],
        out_specs=(acc_spec, acc_spec),
        compiler_params=pltpu.CompilerParams(
            dimension_semantics=("arbitrary",)),
    )(x2)

    # Finish the scalar: unbiased std (matches torch.Tensor.std(), n-1 denom).
    n = jnp.float32(n_elems)
    var = (ss[0, 0] - s[0, 0] * s[0, 0] / n) / (n - 1.0)
    std = jnp.sqrt(jnp.maximum(var, 0.0))
    noise_level = jnp.reshape(std * jnp.float32(std_noise), (1,))

    # ---- Pass 2: streaming tiled add with the scalar resident in SMEM. -----
    out2 = pl.pallas_call(
        _add_noise_kernel,
        out_shape=jax.ShapeDtypeStruct((rows_p, _LANES), x.dtype),
        grid=(num_tiles,),
        in_specs=[pl.BlockSpec(memory_space=pltpu.MemorySpace.SMEM),
                  tile_spec,
                  tile_spec],
        out_specs=pl.BlockSpec((tile_rows, _LANES), lambda i: (i, 0)),
        compiler_params=pltpu.CompilerParams(
            dimension_semantics=("parallel",)),
    )(noise_level, x2, n2)

    return out2.reshape(-1)[:n_elems].reshape(orig_shape)


def _reference(x, uniform_noise, std_noise=0.1):
    noise_level = jnp.std(x, ddof=1) * std_noise
    return x + uniform_noise * noise_level


if __name__ == "__main__":
    N, C, H, W = 2, 4, 16, 16
    key = jax.random.PRNGKey(0)
    kx, kn = jax.random.split(key)
    x = jax.random.normal(kx, (N, C, H, W), dtype=jnp.float32)
    # Randomness for this forward call (deterministic here via fixed key);
    # values differ from torch.rand but the distribution/semantics match.
    uniform_noise = jax.random.uniform(kn, (N, C, H, W), dtype=jnp.float32)

    out = noise_forward(x, uniform_noise, std_noise=0.1)
    out = jax.block_until_ready(out)

    ref = _reference(x, uniform_noise, std_noise=0.1)
    assert out.shape == (N, C, H, W)
    assert jnp.allclose(out, ref, atol=1e-5, rtol=1e-5), float(
        jnp.max(jnp.abs(out - ref)))

    print("KERNEL_OK")
</pallas_src>

<mosaic_0001>
module attributes {stable_mosaic.version = 11 : i64} {
  func.func @_sum_sumsq_kernel(%arg0: i32, %arg1: memref<8x512xf32, #tpu.memory_space<vmem>>, %arg2: memref<1x1xf32, #tpu.memory_space<vmem>>, %arg3: memref<1x1xf32, #tpu.memory_space<vmem>>) attributes {dimension_semantics = [#tpu.dimension_semantics<arbitrary>], iteration_bounds = array<i64: 1>, scalar_prefetch = 0 : i64, scratch_operands = 0 : i64, tpu.core_type = #tpu.core_type<tc>, window_params = [{transform_indices = @transform_0, window_bounds = array<i64: 8, 512>}, {pipeline_mode = #tpu.pipeline_mode<synchronous>, transform_indices = @transform_1, window_bounds = array<i64: 1, 1>}, {pipeline_mode = #tpu.pipeline_mode<synchronous>, transform_indices = @transform_2, window_bounds = array<i64: 1, 1>}]} {
    %c0_i32 = arith.constant 0 : i32
    %0 = arith.cmpi eq, %arg0, %c0_i32 : i32
    %1 = arith.extui %0 : i1 to i32
    %c0_i32_0 = arith.constant 0 : i32
    %2 = arith.cmpi ne, %1, %c0_i32_0 : i32
    scf.if %2 {
      %cst_11 = arith.constant 0.000000e+00 : f32
      %21 = vector.broadcast %cst_11 : f32 to vector<1x1xf32>
      %c0_12 = arith.constant 0 : index
      %c0_13 = arith.constant 0 : index
      %22 = vector.load %arg2[%c0_12, %c0_13] : memref<1x1xf32, #tpu.memory_space<vmem>>, vector<1x1xf32>
      tpu.vector_store %arg2[%c0_12, %c0_13], %21 {strides = array<i32>} : memref<1x1xf32, #tpu.memory_space<vmem>>, vector<1x1xf32>,
      %cst_14 = arith.constant 0.000000e+00 : f32
      %23 = vector.broadcast %cst_14 : f32 to vector<1x1xf32>
      %c0_15 = arith.constant 0 : index
      %c0_16 = arith.constant 0 : index
      %24 = vector.load %arg3[%c0_15, %c0_16] : memref<1x1xf32, #tpu.memory_space<vmem>>, vector<1x1xf32>
      tpu.vector_store %arg3[%c0_15, %c0_16], %23 {strides = array<i32>} : memref<1x1xf32, #tpu.memory_space<vmem>>, vector<1x1xf32>,
    } else {
    }
    %c0 = arith.constant 0 : index
    %c0_1 = arith.constant 0 : index
    %3 = vector.load %arg1[%c0, %c0_1] : memref<8x512xf32, #tpu.memory_space<vmem>>, vector<8x512xf32>
    %c0_2 = arith.constant 0 : index
    %c0_3 = arith.constant 0 : index
    %4 = vector.load %arg2[%c0_2, %c0_3] : memref<1x1xf32, #tpu.memory_space<vmem>>, vector<1x1xf32>
    %5 = vector.shape_cast %3 : vector<8x512xf32> to vector<1x8x512xf32>
    %cst = arith.constant dense<0.000000e+00> : vector<1xf32>
    %6 = vector.multi_reduction <add>, %5, %cst [1, 2] : vector<1x8x512xf32> to vector<1xf32>
    %7 = vector.shape_cast %6 : vector<1xf32> to vector<1x1x1xf32>
    %8 = vector.extract %7[0, 0, 0] : f32 from vector<1x1x1xf32>
    %9 = vector.broadcast %8 : f32 to vector<1x1xf32>
    %10 = arith.addf %4, %9 : vector<1x1xf32>
    %c0_4 = arith.constant 0 : index
    %c0_5 = arith.constant 0 : index
    %11 = vector.load %arg2[%c0_4, %c0_5] : memref<1x1xf32, #tpu.memory_space<vmem>>, vector<1x1xf32>
    tpu.vector_store %arg2[%c0_4, %c0_5], %10 {strides = array<i32>} : memref<1x1xf32, #tpu.memory_space<vmem>>, vector<1x1xf32>,
    %c0_6 = arith.constant 0 : index
    %c0_7 = arith.constant 0 : index
    %12 = vector.load %arg3[%c0_6, %c0_7] : memref<1x1xf32, #tpu.memory_space<vmem>>, vector<1x1xf32>
    %13 = arith.mulf %3, %3 : vector<8x512xf32>
    %14 = vector.shape_cast %13 : vector<8x512xf32> to vector<1x8x512xf32>
    %cst_8 = arith.constant dense<0.000000e+00> : vector<1xf32>
    %15 = vector.multi_reduction <add>, %14, %cst_8 [1, 2] : vector<1x8x512xf32> to vector<1xf32>
    %16 = vector.shape_cast %15 : vector<1xf32> to vector<1x1x1xf32>
    %17 = vector.extract %16[0, 0, 0] : f32 from vector<1x1x1xf32>
    %18 = vector.broadcast %17 : f32 to vector<1x1xf32>
    %19 = arith.addf %12, %18 : vector<1x1xf32>
    %c0_9 = arith.constant 0 : index
    %c0_10 = arith.constant 0 : index
    %20 = vector.load %arg3[%c0_9, %c0_10] : memref<1x1xf32, #tpu.memory_space<vmem>>, vector<1x1xf32>
    tpu.vector_store %arg3[%c0_9, %c0_10], %19 {strides = array<i32>} : memref<1x1xf32, #tpu.memory_space<vmem>>, vector<1x1xf32>,
    return
  }
  func.func @transform_0(%arg0: i32) -> (i32, i32) {
    %c0_i32 = arith.constant 0 : i32
    %c0_i32_0 = arith.constant 0 : i32
    return %arg0, %c0_i32 : i32, i32
  }
  func.func @transform_1(%arg0: i32) -> (i32, i32) {
    %c0_i32 = arith.constant 0 : i32
    %c0_i32_0 = arith.constant 0 : i32
    %c0_i32_1 = arith.constant 0 : i32
    return %c0_i32, %c0_i32_0 : i32, i32
  }
  func.func @transform_2(%arg0: i32) -> (i32, i32) {
    %c0_i32 = arith.constant 0 : i32
    %c0_i32_0 = arith.constant 0 : i32
    %c0_i32_1 = arith.constant 0 : i32
    return %c0_i32, %c0_i32_0 : i32, i32
  }
}

</mosaic_0001>

<llo_original>
// kernel: tpu_custom_call.1
$region0: #{tpu_custom_call.1}
  #allocation0 [shape = 'u32[]', space=smem, size = 0x4, offset = 0x4, fixed_abs, tag = 'smem constant byte address 0x4 - core index']
  #allocation1 [shape = 'u32[144,128]{1,0:T(1,128)}', space=vmem, size = 0x12000, scoped, tag = 'internal scratch']
  %s0 = inlined_call_operand.hbm [shape: f32[8,512], index: 0, kind: input, shape index: {}]
  %s1 = inlined_call_operand.hbm [shape: f32[1,1], index: 1, kind: output, shape index: {0}]
  %s2 = inlined_call_operand.hbm [shape: f32[1,1], index: 2, kind: output, shape index: {1}]
  %3 = xla_tuple %s1, %s2
  %s4 = sld [smem:[#allocation0]]
  $region30: #{tpu_custom_call.1} parent=0
    _
  %s6 = ssub.s32 1, %s4
  %s7 = scalar_select 0, %s6, %s4
  $region1: #{tpu_custom_call.1} parent=0
    #allocation2 [shape = 'u8[16384]{0}', space=vmem, size = 0x4000, scoped, tag = 'input window, operand 0, single buffered']
    #allocation3 [shape = 's32[1]{0}', space=sflag, size = 0x4, scoped, tag = 'scoped memory for tpu_custom_call.1']
    #allocation4 [shape = 's32[1]{0}', space=sflag, size = 0x4, scoped, tag = 'scoped memory for tpu_custom_call.1']
    #allocation5 [shape = 'u8[512]{0}', space=vmem, size = 0x400, scoped, tag = 'output window, operand 0, single buffered']
    #allocation6 [shape = 'u8[512]{0}', space=vmem, size = 0x400, scoped, tag = 'output window, operand 1, single buffered']
    #allocation7 [shape = 's32[1]{0}', space=sflag, size = 0x4, scoped, tag = 'scoped memory for tpu_custom_call.1']
    %8 = vsyncpa [#allocation3], 0
    %9 = vsyncpa [#allocation4], 0
    %10 = vsyncpa [#allocation7], 0
    // Predicated region
    $region2: #{tpu_custom_call.1} parent=1 // pred_check
      _
    $region3: #{tpu_custom_call.1} parent=1 // pred_check_branch
      %12 = sbr.rel (0) target = $region5
    $region4: #{tpu_custom_call.1} parent=1 // pred_region
      %s14 = ssub.s32 512, 512
      %15 = vsyncadd [#allocation3], %s14
      %s17 = sshll.u32 [#allocation2], 4
      %s18 = int_to_ptr.vmem [resolvable:$true] %s17
      %20 = dma.hbm_to_vmem [thread:$0]  %s0, 512, %s18, [#allocation3]
    $region5: #{tpu_custom_call.1} parent=1 // pred_fallthru
      _
    // Predicated region
    $region6: #{tpu_custom_call.1} parent=1 // pred_check
      _
    $region7: #{tpu_custom_call.1} parent=1 // pred_check_branch
      %22 = sbr.rel (0) target = $region9
    $region8: #{tpu_custom_call.1} parent=1 // pred_region
      %23 = dma.done [#allocation3], 512
    $region9: #{tpu_custom_call.1} parent=1 // pred_fallthru
      _
    %p24 = scmp.eq.s32.totalorder 0, 0
    // Predicated region
    $region10: #{tpu_custom_call.1} parent=1 // pred_check
      %p25 = pneg %p24
    $region11: #{tpu_custom_call.1} parent=1 // pred_check_branch
      %27 = sbr.rel (%p25) target = $region13
    $region12: #{tpu_custom_call.1} parent=1 // pred_region
      %vm28 = vcmask 0
      %29 = vst.msk [vmem:[#allocation5] sm:$0x1] %vm28, 0.0
      %30 = vst.msk [vmem:[#allocation6] sm:$0x1] %vm28, 0.0
    $region13: #{tpu_custom_call.1} parent=1 // pred_fallthru
      _
    %v31 = vld [vmem:[#allocation2] sm:$0xff]
    %v32 = vld [vmem:[#allocation2 + $0x8] sm:$0xff]
    %v33 = vld [vmem:[#allocation2 + $0x10] sm:$0xff]
    %v34 = vld [vmem:[#allocation2 + $0x18] sm:$0xff]
    %v35 = vld [vmem:[#allocation5] sm:$0x1]
    %v36 = vadd.f32 %v31, %v32
    %v37 = vadd.f32 %v36, %v33
    %v38 = vadd.f32 %v37, %v34
    %39 = vadd.xlane.f32.xlu0 %v38
    %v40 = vpop.xlane.xlu0 %39
    %v41 = vrot.slane %v40, 4
    %v42 = vadd.f32 %v40, %v41
    %v43 = vrot.slane %v42, 2
    %v44 = vadd.f32 %v42, %v43
    %v45 = vrot.slane %v44, 1
    %v46 = vadd.f32 %v44, %v45
    %s47 = vtos %v46
    %v48 = vstv %s47
    %v49 = vadd.f32 %v35, %v48
    %vm50 = vcmask 0
    %51 = vst.msk [vmem:[#allocation5] sm:$0x1] %vm50, %v49
    %v52 = vld [vmem:[#allocation6] sm:$0x1]
    %v53 = vmul.f32 %v31, %v31
    %v54 = vmul.f32 %v32, %v32
    %v55 = vmul.f32 %v33, %v33
    %v56 = vmul.f32 %v34, %v34
    %v57 = vadd.f32 %v53, %v54
    %v58 = vadd.f32 %v57, %v55
    %v59 = vadd.f32 %v58, %v56
    %60 = vadd.xlane.f32.xlu0 %v59
    %v61 = vpop.xlane.xlu0 %60
    %v62 = vrot.slane %v61, 4
    %v63 = vadd.f32 %v61, %v62
    %v64 = vrot.slane %v63, 2
    %v65 = vadd.f32 %v63, %v64
    %v66 = vrot.slane %v65, 1
    %v67 = vadd.f32 %v65, %v66
    %s68 = vtos %v67
    %v69 = vstv %s68
    %v70 = vadd.f32 %v52, %v69
    %71 = vst.msk [vmem:[#allocation6] sm:$0x1] %vm50, %v70
    // Predicated region
    $region14: #{tpu_custom_call.1} parent=1 // pred_check
      _
    $region15: #{tpu_custom_call.1} parent=1 // pred_check_branch
      %73 = sbr.rel (0) target = $region17
    $region16: #{tpu_custom_call.1} parent=1 // pred_region
      %s75 = ssub.s32 16, 16
      %76 = vsyncadd [#allocation4], %s75
      %s78 = sshll.u32 [#allocation5], 4
      %s79 = int_to_ptr.vmem [resolvable:$true] %s78
      %81 = dma.vmem_to_hbm [thread:$0]  %s79, 16, %s1, [#allocation4]
    $region17: #{tpu_custom_call.1} parent=1 // pred_fallthru
      _
    // Predicated region
    $region18: #{tpu_custom_call.1} parent=1 // pred_check
      _
    $region19: #{tpu_custom_call.1} parent=1 // pred_check_branch
      %83 = sbr.rel (0) target = $region21
    $region20: #{tpu_custom_call.1} parent=1 // pred_region
      %s85 = ssub.s32 16, 16
      %86 = vsyncadd [#allocation7], %s85
      %s88 = sshll.u32 [#allocation6], 4
      %s89 = int_to_ptr.vmem [resolvable:$true] %s88
      %91 = dma.vmem_to_hbm [thread:$0]  %s89, 16, %s2, [#allocation7]
    $region21: #{tpu_custom_call.1} parent=1 // pred_fallthru
      _
    // Predicated region
    $region22: #{tpu_custom_call.1} parent=1 // pred_check
      _
    $region23: #{tpu_custom_call.1} parent=1 // pred_check_branch
      %93 = sbr.rel (0) target = $region25
    $region24: #{tpu_custom_call.1} parent=1 // pred_region
      %94 = dma.done [#allocation4], 16
    $region25: #{tpu_custom_call.1} parent=1 // pred_fallthru
      _
    // Predicated region
    $region26: #{tpu_custom_call.1} parent=1 // pred_check
      _
    $region27: #{tpu_custom_call.1} parent=1 // pred_check_branch
      %96 = sbr.rel (0) target = $region29
    $region28: #{tpu_custom_call.1} parent=1 // pred_region
      %97 = dma.done [#allocation7], 16
    $region29: #{tpu_custom_call.1} parent=1 // pred_fallthru
      _
    %98 = vsyncpa [#allocation3], 1
    %99 = vsyncpa [#allocation4], 1
    %100 = vsyncpa [#allocation7], 1

</llo_original>
